<compile_context>
chip_gen: v7x
topology: tpu7x:2x2x1
jax: 0.10.0
libtpu: 0.0.40
codegen_flags: <defaults>
</compile_context>

<pallas_src>
import jax
import jax.numpy as jnp
from jax.experimental import pallas as pl
from jax.experimental.pallas import tpu as pltpu


def _round_up(x, m):
    return (x + m - 1) // m * m


def _linpool3_kernel(x_ref, wbd_ref, w4m_ref, w4a_ref, b4_ref, o_ref):
    """One batch tile.

    x_ref   : (TB, S, 900) f32  gathered embeddings
    wbd_ref : (900, PH)    f32  block-diagonal [w1|w2|w3], zero-padded to PH
    w4m_ref : (1, PH)      f32  fc4 rows for the max-pool half (zero-padded)
    w4a_ref : (1, PH)      f32  fc4 rows for the mean half, pre-scaled by 1/S
    b4_ref  : (1, 1)       f32  fc4 bias with b1/b2/b3 folded in (SMEM scalar)
    o_ref   : (1, 1, TB)   f32  lane-dense per-tile output row
    """
    tb, s, d = x_ref.shape
    x2d = x_ref[...].reshape(tb * s, d)

    # Single MXU matmul produces x_cat (= concat(h1, h2, h3), padded) directly.
    h = jnp.dot(x2d, wbd_ref[...], preferred_element_type=jnp.float32)
    h = h.reshape(tb, s, -1)                        # (TB, S, PH)

    max_pool = jnp.max(h, axis=1)                   # (TB, PH)
    sum_pool = jnp.sum(h, axis=1)                   # (TB, PH); 1/S is in w4a

    # fc4 on VPU/XLU: broadcast-multiply + lane reduce (N=1 MXU matmul wastes
    # the systolic array).  Padded lanes contribute exactly zero.
    y = jnp.sum(max_pool * w4m_ref[...] + sum_pool * w4a_ref[...], axis=1)
    o_ref[...] = (y + b4_ref[0, 0]).reshape(1, 1, tb)


def _pack_params(w1, b1, w2, b2, w3, b3, w4, b4, seq_len):
    """Offline constant folding: block-diagonal W, bias/mean folded into fc4."""
    d_in, hidden = w1.shape                 # (300, H)
    emb_dim = 3 * d_in                      # 900
    three_h = 3 * hidden
    pad_h = _round_up(three_h, 128)

    w_bd = jnp.zeros((emb_dim, pad_h), jnp.float32)
    w_bd = w_bd.at[0:d_in, 0:hidden].set(w1)
    w_bd = w_bd.at[d_in:2 * d_in, hidden:2 * hidden].set(w2)
    w_bd = w_bd.at[2 * d_in:3 * d_in, 2 * hidden:3 * hidden].set(w3)

    b_cat = jnp.concatenate(
        [b1.reshape(-1), b2.reshape(-1), b3.reshape(-1)])       # (3H,)
    w4_max = w4[:three_h, 0]                                    # (3H,)
    w4_avg = w4[three_h:, 0]                                    # (3H,)

    # max(h + b) = max(h) + b and mean(h + b) = mean(h) + b per feature, so the
    # fc1/2/3 biases pass through both pools and fold into the fc4 bias.
    b4_eff = (b4.reshape(()) + jnp.dot(b_cat, w4_max)
              + jnp.dot(b_cat, w4_avg)).reshape(1, 1).astype(jnp.float32)

    w4m = jnp.zeros((1, pad_h), jnp.float32).at[0, :three_h].set(w4_max)
    w4a = jnp.zeros((1, pad_h), jnp.float32).at[0, :three_h].set(
        w4_avg / jnp.float32(seq_len))
    return w_bd, w4m, w4a, b4_eff, pad_h


def _pick_batch_tile(batch, seq, emb_dim):
    # Target <= ~6 MiB per x buffer so the double-buffered tile fits v5e's
    # small scoped VMEM and v7x's 64 MiB physical VMEM with headroom.
    per_row_bytes = seq * emb_dim * 4
    tb = max(1, (6 * 1024 * 1024) // per_row_bytes)
    tb = min(tb, batch, 256)
    if tb >= 8:
        tb = (tb // 8) * 8          # sublane-friendly tile height
    return tb


def linpool3_forward(sents, emb_table, w1, b1, w2, b2, w3, b3, w4, b4):
    batch, seq = sents.shape
    emb_dim = emb_table.shape[1]                    # 900

    # Glue: embedding lookup stays in XLA.
    x0 = jnp.take(emb_table, sents, axis=0).astype(jnp.float32)   # (B, S, 900)

    w_bd, w4m, w4a, b4_eff, pad_h = _pack_params(
        w1, b1, w2, b2, w3, b3, w4, b4, seq)

    tb = _pick_batch_tile(batch, seq, emb_dim)
    n_tiles = pl.cdiv(batch, tb)
    b_pad = n_tiles * tb
    if b_pad != batch:
        # Padded rows compute harmless zeros and are sliced off below.
        x0 = jnp.pad(x0, ((0, b_pad - batch), (0, 0), (0, 0)))

    x_tile_bytes = tb * seq * emb_dim * 4
    h_bytes = tb * seq * pad_h * 4
    w_bytes = (emb_dim * pad_h + 2 * pad_h) * 4
    vmem_est = 2 * x_tile_bytes + 2 * h_bytes + 2 * w_bytes + (8 << 20)
    vmem_limit = int(min(max(vmem_est, 32 << 20), 48 << 20))

    out = pl.pallas_call(
        _linpool3_kernel,
        out_shape=jax.ShapeDtypeStruct((n_tiles, 1, tb), jnp.float32),
        grid_spec=pltpu.PrefetchScalarGridSpec(
            num_scalar_prefetch=0,
            grid=(n_tiles,),
            in_specs=[
                pl.BlockSpec((tb, seq, emb_dim), lambda i: (i, 0, 0)),
                pl.BlockSpec((emb_dim, pad_h), lambda i: (0, 0)),
                pl.BlockSpec((1, pad_h), lambda i: (0, 0)),
                pl.BlockSpec((1, pad_h), lambda i: (0, 0)),
                pl.BlockSpec(memory_space=pltpu.MemorySpace.SMEM),
            ],
            out_specs=pl.BlockSpec((1, 1, tb), lambda i: (i, 0, 0)),
        ),
        compiler_params=pltpu.CompilerParams(
            dimension_semantics=("parallel",),
            vmem_limit_bytes=vmem_limit,
        ),
    )(x0, w_bd, w4m, w4a, b4_eff)

    # Lane-dense (n_tiles, 1, TB) kernel output -> (B, 1) column in the wrapper.
    return out.reshape(b_pad)[:batch].reshape(batch, 1)


def _reference(sents, emb_table, w1, b1, w2, b2, w3, b3, w4, b4):
    x0 = jnp.take(emb_table, sents, axis=0).astype(jnp.float32)
    h1 = x0[:, :, 0:300] @ w1 + b1
    h2 = x0[:, :, 300:600] @ w2 + b2
    h3 = x0[:, :, 600:900] @ w3 + b3
    x_cat = jnp.concatenate((h1, h2, h3), axis=2)
    long_output = jnp.concatenate(
        (jnp.max(x_cat, axis=1), jnp.mean(x_cat, axis=1)), axis=1)
    return long_output @ w4 + b4


if __name__ == "__main__":
    # Small, deterministic problem consistent with the module:
    # embedding_dim must be 900 (forward slices [:300], [300:600], [600:900]).
    B, S = 2, 8
    VOCAB = 50
    EMB_DIM = 900
    HIDDEN = 32          # hidden_dim
    PADDING_IDX = 0      # from_pretrained + padding_idx only affects grads

    key = jax.random.PRNGKey(0)
    k_emb, k_tok, k1, k2, k3, k4, kb1, kb2, kb3, kb4 = jax.random.split(key, 10)

    emb_table = jax.random.normal(k_emb, (VOCAB, EMB_DIM), dtype=jnp.float32) * 0.1
    sents = jax.random.randint(k_tok, (B, S), 0, VOCAB, dtype=jnp.int32)

    # nn.Linear(300, H): weight (H, 300), bias (H). Stored here pre-transposed
    # as (in, out); biases as (1, H).
    s_in = 1.0 / jnp.sqrt(300.0)
    w1 = jax.random.uniform(k1, (300, HIDDEN), jnp.float32, -s_in, s_in)
    w2 = jax.random.uniform(k2, (300, HIDDEN), jnp.float32, -s_in, s_in)
    w3 = jax.random.uniform(k3, (300, HIDDEN), jnp.float32, -s_in, s_in)
    b1 = jax.random.uniform(kb1, (1, HIDDEN), jnp.float32, -s_in, s_in)
    b2 = jax.random.uniform(kb2, (1, HIDDEN), jnp.float32, -s_in, s_in)
    b3 = jax.random.uniform(kb3, (1, HIDDEN), jnp.float32, -s_in, s_in)

    # fc4: Linear(2 * H * 900 // 300, 1) == Linear(6H, 1)
    fan4 = 2 * HIDDEN * EMB_DIM // 300
    s4 = 1.0 / jnp.sqrt(float(fan4))
    w4 = jax.random.uniform(k4, (fan4, 1), jnp.float32, -s4, s4)
    b4 = jax.random.uniform(kb4, (1, 1), jnp.float32, -s4, s4)

    y = linpool3_forward(sents, emb_table, w1, b1, w2, b2, w3, b3, w4, b4)
    y = jax.block_until_ready(y)

    y_ref = _reference(sents, emb_table, w1, b1, w2, b2, w3, b3, w4, b4)
    assert y.shape == (B, 1)
    assert jnp.allclose(y, y_ref, atol=1e-3, rtol=1e-3), (
        f"max abs diff {jnp.max(jnp.abs(y - y_ref))}")

    print("KERNEL_OK")
</pallas_src>

<mosaic_0001>
module attributes {stable_mosaic.version = 11 : i64} {
  func.func @_linpool3_kernel(%arg0: i32, %arg1: memref<2x8x900xf32, #tpu.memory_space<vmem>>, %arg2: memref<900x128xf32, #tpu.memory_space<vmem>>, %arg3: memref<1x128xf32, #tpu.memory_space<vmem>>, %arg4: memref<1x128xf32, #tpu.memory_space<vmem>>, %arg5: memref<1x1xf32, #tpu.memory_space<smem>>, %arg6: memref<1x1x2xf32, #tpu.memory_space<vmem>>) attributes {dimension_semantics = [#tpu.dimension_semantics<parallel>], iteration_bounds = array<i64: 1>, scalar_prefetch = 0 : i64, scratch_operands = 0 : i64, tpu.core_type = #tpu.core_type<tc>, window_params = [{transform_indices = @transform_0, window_bounds = array<i64: 2, 8, 900>}, {pipeline_mode = #tpu.pipeline_mode<synchronous>, transform_indices = @transform_1, window_bounds = array<i64: 900, 128>}, {pipeline_mode = #tpu.pipeline_mode<synchronous>, transform_indices = @transform_2, window_bounds = array<i64: 1, 128>}, {pipeline_mode = #tpu.pipeline_mode<synchronous>, transform_indices = @transform_3, window_bounds = array<i64: 1, 128>}, {transform_indices = @transform_4, window_bounds = array<i64: 1, 1>}, {transform_indices = @transform_5, window_bounds = array<i64: 1, 1, 2>}]} {
    %c0 = arith.constant 0 : index
    %c0_0 = arith.constant 0 : index
    %c0_1 = arith.constant 0 : index
    %0 = vector.load %arg1[%c0, %c0_0, %c0_1] : memref<2x8x900xf32, #tpu.memory_space<vmem>>, vector<2x8x900xf32>
    %1 = vector.shape_cast %0 : vector<2x8x900xf32> to vector<16x900xf32>
    %c0_2 = arith.constant 0 : index
    %c0_3 = arith.constant 0 : index
    %2 = vector.load %arg2[%c0_2, %c0_3] : memref<900x128xf32, #tpu.memory_space<vmem>>, vector<900x128xf32>
    %cst = arith.constant dense<0.000000e+00> : vector<16x128xf32>
    %3 = tpu.matmul %1, %2, %cst {dimension_numbers = #tpu.dot_dimension_numbers<[1], [0], [0], [1], [0, 0, 1, 1], [], []>} : vector<16x900xf32>, vector<900x128xf32>, vector<16x128xf32> -> vector<16x128xf32>
    %4 = vector.shape_cast %3 : vector<16x128xf32> to vector<2x8x128xf32>
    %cst_4 = arith.constant dense<0xFF800000> : vector<2x128xf32>
    %5 = vector.multi_reduction <maximumf>, %4, %cst_4 [1] : vector<2x8x128xf32> to vector<2x128xf32>
    %cst_5 = arith.constant dense<0.000000e+00> : vector<2x128xf32>
    %6 = vector.multi_reduction <add>, %4, %cst_5 [1] : vector<2x8x128xf32> to vector<2x128xf32>
    %c0_6 = arith.constant 0 : index
    %c0_7 = arith.constant 0 : index
    %7 = vector.load %arg3[%c0_6, %c0_7] : memref<1x128xf32, #tpu.memory_space<vmem>>, vector<1x128xf32>
    %8 = vector.broadcast %7 : vector<1x128xf32> to vector<2x128xf32>
    %9 = arith.mulf %5, %8 : vector<2x128xf32>
    %c0_8 = arith.constant 0 : index
    %c0_9 = arith.constant 0 : index
    %10 = vector.load %arg4[%c0_8, %c0_9] : memref<1x128xf32, #tpu.memory_space<vmem>>, vector<1x128xf32>
    %11 = vector.broadcast %10 : vector<1x128xf32> to vector<2x128xf32>
    %12 = arith.mulf %6, %11 : vector<2x128xf32>
    %13 = arith.addf %9, %12 : vector<2x128xf32>
    %cst_10 = arith.constant dense<0.000000e+00> : vector<2xf32>
    %14 = vector.multi_reduction <add>, %13, %cst_10 [1] : vector<2x128xf32> to vector<2xf32>
    %c0_11 = arith.constant 0 : index
    %c0_12 = arith.constant 0 : index
    %15 = memref.load %arg5[%c0_11, %c0_12] : memref<1x1xf32, #tpu.memory_space<smem>>
    %16 = vector.broadcast %15 : f32 to vector<2xf32>
    %17 = arith.addf %14, %16 : vector<2xf32>
    %18 = vector.shape_cast %17 : vector<2xf32> to vector<1x1x2xf32>
    %c0_13 = arith.constant 0 : index
    %c0_14 = arith.constant 0 : index
    %c0_15 = arith.constant 0 : index
    %19 = vector.load %arg6[%c0_13, %c0_14, %c0_15] : memref<1x1x2xf32, #tpu.memory_space<vmem>>, vector<1x1x2xf32>
    tpu.vector_store %arg6[%c0_13, %c0_14, %c0_15], %18 {strides = array<i32>} : memref<1x1x2xf32, #tpu.memory_space<vmem>>, vector<1x1x2xf32>,
    return
  }
  func.func @transform_0(%arg0: i32) -> (i32, i32, i32) {
    %c0_i32 = arith.constant 0 : i32
    %c0_i32_0 = arith.constant 0 : i32
    %c0_i32_1 = arith.constant 0 : i32
    return %arg0, %c0_i32, %c0_i32_0 : i32, i32, i32
  }
  func.func @transform_1(%arg0: i32) -> (i32, i32) {
    %c0_i32 = arith.constant 0 : i32
    %c0_i32_0 = arith.constant 0 : i32
    %c0_i32_1 = arith.constant 0 : i32
    return %c0_i32, %c0_i32_0 : i32, i32
  }
  func.func @transform_2(%arg0: i32) -> (i32, i32) {
    %c0_i32 = arith.constant 0 : i32
    %c0_i32_0 = arith.constant 0 : i32
    %c0_i32_1 = arith.constant 0 : i32
    return %c0_i32, %c0_i32_0 : i32, i32
  }
  func.func @transform_3(%arg0: i32) -> (i32, i32) {
    %c0_i32 = arith.constant 0 : i32
    %c0_i32_0 = arith.constant 0 : i32
    %c0_i32_1 = arith.constant 0 : i32
    return %c0_i32, %c0_i32_0 : i32, i32
  }
  func.func @transform_4(%arg0: i32) -> (i32, i32) {
    %c0_i32 = arith.constant 0 : i32
    %c0_i32_0 = arith.constant 0 : i32
    %c0_i32_1 = arith.constant 0 : i32
    return %c0_i32, %c0_i32_0 : i32, i32
  }
  func.func @transform_5(%arg0: i32) -> (i32, i32, i32) {
    %c0_i32 = arith.constant 0 : i32
    %c0_i32_0 = arith.constant 0 : i32
    %c0_i32_1 = arith.constant 0 : i32
    return %arg0, %c0_i32, %c0_i32_0 : i32, i32, i32
  }
}

</mosaic_0001>

<llo_original>
// kernel: tpu_custom_call.1
$region0: #{tpu_custom_call.1}
  #allocation0 [shape = 'u32[]', space=smem, size = 0x4, offset = 0x4, fixed_abs, tag = 'smem constant byte address 0x4 - core index']
  #allocation1 [shape = 'u32[144,128]{1,0:T(1,128)}', space=vmem, size = 0x12000, scoped, tag = 'internal scratch']
  #allocation2 [shape = 'f32[1,1]{1,0:T(1,128)S(6)}', space=smem, size = 0x200, scoped, tag = 'scoped memory for tpu_custom_call.1']
  %s0 = inlined_call_operand.hbm [shape: f32[2,8,900], index: 0, kind: input, shape index: {}]
  %s1 = inlined_call_operand.hbm [shape: f32[900,128], index: 1, kind: input, shape index: {}]
  %s2 = inlined_call_operand.vmem [shape: f32[1,128], index: 2, kind: input, shape index: {}]
  %s3 = inlined_call_operand.vmem [shape: f32[1,128], index: 3, kind: input, shape index: {}]
  %s4 = inlined_call_operand.<no memory space> [shape: f32[1,1], index: 4, kind: input, shape index: {}]
  %s5 = inlined_call_operand.hbm [shape: f32[1,1,2], index: 5, kind: output, shape index: {}]
  %s6 = sld [smem:[#allocation0]]
  $region38: #{tpu_custom_call.1} parent=0
    _
  %s8 = ssub.s32 1, %s6
  %s9 = scalar_select 0, %s8, %s6
  %10 = sst [smem:[#allocation2]] %s4
  $region1: #{tpu_custom_call.1} parent=0
    #allocation3 [shape = 'u8[65536]{0}', space=vmem, size = 0x10000, scoped, tag = 'input window, operand 0, single buffered']
    #allocation4 [shape = 's32[1]{0}', space=sflag, size = 0x4, scoped, tag = 'scoped memory for tpu_custom_call.1']
    #allocation5 [shape = 's32[1]{0}', space=sflag, size = 0x4, scoped, tag = 'scoped memory for tpu_custom_call.1']
    #allocation6 [shape = 'u8[462848]{0}', space=vmem, size = 0x71000, scoped, tag = 'input window, operand 1, single buffered']
    #allocation7 [shape = 's32[1]{0}', space=sflag, size = 0x4, scoped, tag = 'scoped memory for tpu_custom_call.1']
    #allocation8 [shape = 'u8[512]{0}', space=vmem, size = 0x400, scoped, tag = 'output window, operand 0, single buffered']
    %11 = vsyncpa [#allocation4], 0
    %12 = vsyncpa [#allocation7], 0
    %13 = vsyncpa [#allocation5], 0
    // Predicated region
    $region2: #{tpu_custom_call.1} parent=1 // pred_check
      _
    $region3: #{tpu_custom_call.1} parent=1 // pred_check_branch
      %15 = sbr.rel (0) target = $region5
    $region4: #{tpu_custom_call.1} parent=1 // pred_region
      %s17 = ssub.s32 2048, 2048
      %18 = vsyncadd [#allocation4], %s17
      %s19 = sshll.u32 [#allocation3], 4
      %s20 = int_to_ptr.vmem [resolvable:$true] %s19
      %25 = dma.hbm_to_vmem [thread:$0]  %s0, 2048, %s20, [#allocation4], 1024, 1024, 64
    $region5: #{tpu_custom_call.1} parent=1 // pred_fallthru
      _
    // Predicated region
    $region6: #{tpu_custom_call.1} parent=1 // pred_check
      _
    $region7: #{tpu_custom_call.1} parent=1 // pred_check_branch
      %27 = sbr.rel (0) target = $region9
    $region8: #{tpu_custom_call.1} parent=1 // pred_region
      %s29 = ssub.s32 14464, 14464
      %30 = vsyncadd [#allocation7], %s29
      %s31 = sshll.u32 [#allocation6], 4
      %s32 = int_to_ptr.vmem [resolvable:$true] %s31
      %37 = dma.hbm_to_vmem [thread:$0]  %s1, 14464, %s32, [#allocation7], 128, 128, 8
    $region9: #{tpu_custom_call.1} parent=1 // pred_fallthru
      _
    // Predicated region
    $region10: #{tpu_custom_call.1} parent=1 // pred_check
      _
    $region11: #{tpu_custom_call.1} parent=1 // pred_check_branch
      %39 = sbr.rel (0) target = $region13
    $region12: #{tpu_custom_call.1} parent=1 // pred_region
      _
    $region13: #{tpu_custom_call.1} parent=1 // pred_fallthru
      _
    // Predicated region
    $region14: #{tpu_custom_call.1} parent=1 // pred_check
      _
    $region15: #{tpu_custom_call.1} parent=1 // pred_check_branch
      %41 = sbr.rel (0) target = $region17
    $region16: #{tpu_custom_call.1} parent=1 // pred_region
      _
    $region17: #{tpu_custom_call.1} parent=1 // pred_fallthru
      _
    // Predicated region
    $region18: #{tpu_custom_call.1} parent=1 // pred_check
      _
    $region19: #{tpu_custom_call.1} parent=1 // pred_check_branch
      %43 = sbr.rel (0) target = $region21
    $region20: #{tpu_custom_call.1} parent=1 // pred_region
      _
    $region21: #{tpu_custom_call.1} parent=1 // pred_fallthru
      _
    // Predicated region
    $region22: #{tpu_custom_call.1} parent=1 // pred_check
      _
    $region23: #{tpu_custom_call.1} parent=1 // pred_check_branch
      %45 = sbr.rel (0) target = $region25
    $region24: #{tpu_custom_call.1} parent=1 // pred_region
      %46 = dma.done [#allocation4], 2048
    $region25: #{tpu_custom_call.1} parent=1 // pred_fallthru
      _
    // Predicated region
    $region26: #{tpu_custom_call.1} parent=1 // pred_check
      _
    $region27: #{tpu_custom_call.1} parent=1 // pred_check_branch
      %48 = sbr.rel (0) target = $region29
    $region28: #{tpu_custom_call.1} parent=1 // pred_region
      %49 = dma.done [#allocation7], 14464
    $region29: #{tpu_custom_call.1} parent=1 // pred_fallthru
      _
    %v50 = vld [vmem:[#allocation3] sm:$0xff]
    %v51 = vld [vmem:[#allocation3 + $0x8] sm:$0xff]
    %v52 = vld [vmem:[#allocation3 + $0x10] sm:$0xff]
    %v53 = vld [vmem:[#allocation3 + $0x18] sm:$0xff]
    %v54 = vld [vmem:[#allocation3 + $0x20] sm:$0xff]
    %v55 = vld [vmem:[#allocation3 + $0x28] sm:$0xff]
    %v56 = vld [vmem:[#allocation3 + $0x30] sm:$0xff]
    %v57 = vld [vmem:[#allocation3 + $0x38] sm:$0xff]
    %v58 = vld [vmem:[#allocation3 + $0x40] sm:$0xff]
    %v59 = vld [vmem:[#allocation3 + $0x48] sm:$0xff]
    %v60 = vld [vmem:[#allocation3 + $0x50] sm:$0xff]
    %v61 = vld [vmem:[#allocation3 + $0x58] sm:$0xff]
    %v62 = vld [vmem:[#allocation3 + $0x60] sm:$0xff]
    %v63 = vld [vmem:[#allocation3 + $0x68] sm:$0xff]
    %v64 = vld [vmem:[#allocation3 + $0x70] sm:$0xff]
    %v65 = vld [vmem:[#allocation3 + $0x78] sm:$0xff]
    %v66 = vld [vmem:[#allocation6] sm:$0xff]
    %v67 = vld [vmem:[#allocation6 + $0x8] sm:$0xff]
    %v68 = vld [vmem:[#allocation6 + $0x10] sm:$0xff]
    %v69 = vld [vmem:[#allocation6 + $0x18] sm:$0xff]
    %v70 = vld [vmem:[#allocation6 + $0x20] sm:$0xff]
    %v71 = vld [vmem:[#allocation6 + $0x28] sm:$0xff]
    %v72 = vld [vmem:[#allocation6 + $0x30] sm:$0xff]
    %v73 = vld [vmem:[#allocation6 + $0x38] sm:$0xff]
    %v74 = vld [vmem:[#allocation6 + $0x40] sm:$0xff]
    %v75 = vld [vmem:[#allocation6 + $0x48] sm:$0xff]
    %v76 = vld [vmem:[#allocation6 + $0x50] sm:$0xff]
    %v77 = vld [vmem:[#allocation6 + $0x58] sm:$0xff]
    %v78 = vld [vmem:[#allocation6 + $0x60] sm:$0xff]
    %v79 = vld [vmem:[#allocation6 + $0x68] sm:$0xff]
    %v80 = vld [vmem:[#allocation6 + $0x70] sm:$0xff]
    %v81 = vld [vmem:[#allocation6 + $0x78] sm:$0xff]
    %v82 = vld [vmem:[#allocation6 + $0x80] sm:$0xff]
    %v83 = vld [vmem:[#allocation6 + $0x88] sm:$0xff]
    %v84 = vld [vmem:[#allocation6 + $0x90] sm:$0xff]
    %v85 = vld [vmem:[#allocation6 + $0x98] sm:$0xff]
    %v86 = vld [vmem:[#allocation6 + $0xa0] sm:$0xff]
    %v87 = vld [vmem:[#allocation6 + $0xa8] sm:$0xff]
    %v88 = vld [vmem:[#allocation6 + $0xb0] sm:$0xff]
    %v89 = vld [vmem:[#allocation6 + $0xb8] sm:$0xff]
    %v90 = vld [vmem:[#allocation6 + $0xc0] sm:$0xff]
    %v91 = vld [vmem:[#allocation6 + $0xc8] sm:$0xff]
    %v92 = vld [vmem:[#allocation6 + $0xd0] sm:$0xff]
    %v93 = vld [vmem:[#allocation6 + $0xd8] sm:$0xff]
    %v94 = vld [vmem:[#allocation6 + $0xe0] sm:$0xff]
    %v95 = vld [vmem:[#allocation6 + $0xe8] sm:$0xff]
    %v96 = vld [vmem:[#allocation6 + $0xf0] sm:$0xff]
    %v97 = vld [vmem:[#allocation6 + $0xf8] sm:$0xff]
    %v98 = vld [vmem:[#allocation6 + $0x100] sm:$0xff]
    %v99 = vld [vmem:[#allocation6 + $0x108] sm:$0xff]
    %v100 = vld [vmem:[#allocation6 + $0x110] sm:$0xff]
    %v101 = vld [vmem:[#allocation6 + $0x118] sm:$0xff]
    %v102 = vld [vmem:[#allocation6 + $0x120] sm:$0xff]
    %v103 = vld [vmem:[#allocation6 + $0x128] sm:$0xff]
    %v104 = vld [vmem:[#allocation6 + $0x130] sm:$0xff]
    %v105 = vld [vmem:[#allocation6 + $0x138] sm:$0xff]
    %v106 = vld [vmem:[#allocation6 + $0x140] sm:$0xff]
    %v107 = vld [vmem:[#allocation6 + $0x148] sm:$0xff]
    %v108 = vld [vmem:[#allocation6 + $0x150] sm:$0xff]
    %v109 = vld [vmem:[#allocation6 + $0x158] sm:$0xff]
    %v110 = vld [vmem:[#allocation6 + $0x160] sm:$0xff]
    %v111 = vld [vmem:[#allocation6 + $0x168] sm:$0xff]
    %v112 = vld [vmem:[#allocation6 + $0x170] sm:$0xff]
    %v113 = vld [vmem:[#allocation6 + $0x178] sm:$0xff]
    %v114 = vld [vmem:[#allocation6 + $0x180] sm:$0xff]
    %v115 = vld [vmem:[#allocation6 + $0x188] sm:$0xff]
    %v116 = vld [vmem:[#allocation6 + $0x190] sm:$0xff]
    %v117 = vld [vmem:[#allocation6 + $0x198] sm:$0xff]
    %v118 = vld [vmem:[#allocation6 + $0x1a0] sm:$0xff]
    %v119 = vld [vmem:[#allocation6 + $0x1a8] sm:$0xff]
    %v120 = vld [vmem:[#allocation6 + $0x1b0] sm:$0xff]
    %v121 = vld [vmem:[#allocation6 + $0x1b8] sm:$0xff]
    %v122 = vld [vmem:[#allocation6 + $0x1c0] sm:$0xff]
    %v123 = vld [vmem:[#allocation6 + $0x1c8] sm:$0xff]
    %v124 = vld [vmem:[#allocation6 + $0x1d0] sm:$0xff]
    %v125 = vld [vmem:[#allocation6 + $0x1d8] sm:$0xff]
    %v126 = vld [vmem:[#allocation6 + $0x1e0] sm:$0xff]
    %v127 = vld [vmem:[#allocation6 + $0x1e8] sm:$0xff]
    %v128 = vld [vmem:[#allocation6 + $0x1f0] sm:$0xff]
    %v129 = vld [vmem:[#allocation6 + $0x1f8] sm:$0xff]
    %v130 = vld [vmem:[#allocation6 + $0x200] sm:$0xff]
    %v131 = vld [vmem:[#allocation6 + $0x208] sm:$0xff]
    %v132 = vld [vmem:[#allocation6 + $0x210] sm:$0xff]
    %v133 = vld [vmem:[#allocation6 + $0x218] sm:$0xff]
    %v134 = vld [vmem:[#allocation6 + $0x220] sm:$0xff]
    %v135 = vld [vmem:[#allocation6 + $0x228] sm:$0xff]
    %v136 = vld [vmem:[#allocation6 + $0x230] sm:$0xff]
    %v137 = vld [vmem:[#allocation6 + $0x238] sm:$0xff]
    %v138 = vld [vmem:[#allocation6 + $0x240] sm:$0xff]
    %v139 = vld [vmem:[#allocation6 + $0x248] sm:$0xff]
    %v140 = vld [vmem:[#allocation6 + $0x250] sm:$0xff]
    %v141 = vld [vmem:[#allocation6 + $0x258] sm:$0xff]
    %v142 = vld [vmem:[#allocation6 + $0x260] sm:$0xff]
    %v143 = vld [vmem:[#allocation6 + $0x268] sm:$0xff]
    %v144 = vld [vmem:[#allocation6 + $0x270] sm:$0xff]
    %v145 = vld [vmem:[#allocation6 + $0x278] sm:$0xff]
    %v146 = vld [vmem:[#allocation6 + $0x280] sm:$0xff]
    %v147 = vld [vmem:[#allocation6 + $0x288] sm:$0xff]
    %v148 = vld [vmem:[#allocation6 + $0x290] sm:$0xff]
    %v149 = vld [vmem:[#allocation6 + $0x298] sm:$0xff]
    %v150 = vld [vmem:[#allocation6 + $0x2a0] sm:$0xff]
    %v151 = vld [vmem:[#allocation6 + $0x2a8] sm:$0xff]
    %v152 = vld [vmem:[#allocation6 + $0x2b0] sm:$0xff]
    %v153 = vld [vmem:[#allocation6 + $0x2b8] sm:$0xff]
    %v154 = vld [vmem:[#allocation6 + $0x2c0] sm:$0xff]
    %v155 = vld [vmem:[#allocation6 + $0x2c8] sm:$0xff]
    %v156 = vld [vmem:[#allocation6 + $0x2d0] sm:$0xff]
    %v157 = vld [vmem:[#allocation6 + $0x2d8] sm:$0xff]
    %v158 = vld [vmem:[#allocation6 + $0x2e0] sm:$0xff]
    %v159 = vld [vmem:[#allocation6 + $0x2e8] sm:$0xff]
    %v160 = vld [vmem:[#allocation6 + $0x2f0] sm:$0xff]
    %v161 = vld [vmem:[#allocation6 + $0x2f8] sm:$0xff]
    %v162 = vld [vmem:[#allocation6 + $0x300] sm:$0xff]
    %v163 = vld [vmem:[#allocation6 + $0x308] sm:$0xff]
    %v164 = vld [vmem:[#allocation6 + $0x310] sm:$0xff]
    %v165 = vld [vmem:[#allocation6 + $0x318] sm:$0xff]
    %v166 = vld [vmem:[#allocation6 + $0x320] sm:$0xff]
    %v167 = vld [vmem:[#allocation6 + $0x328] sm:$0xff]
    %v168 = vld [vmem:[#allocation6 + $0x330] sm:$0xff]
    %v169 = vld [vmem:[#allocation6 + $0x338] sm:$0xff]
    %v170 = vld [vmem:[#allocation6 + $0x340] sm:$0xff]
    %v171 = vld [vmem:[#allocation6 + $0x348] sm:$0xff]
    %v172 = vld [vmem:[#allocation6 + $0x350] sm:$0xff]
    %v173 = vld [vmem:[#allocation6 + $0x358] sm:$0xff]
    %v174 = vld [vmem:[#allocation6 + $0x360] sm:$0xff]
    %v175 = vld [vmem:[#allocation6 + $0x368] sm:$0xff]
    %v176 = vld [vmem:[#allocation6 + $0x370] sm:$0xff]
    %v177 = vld [vmem:[#allocation6 + $0x378] sm:$0xff]
    %v178 = vld [vmem:[#allocation6 + $0x380] sm:$0xf]
    %vm179 = vcmask 31744
    %v181 = vsel %vm179, %v57, 0
    %v184 = vsel %vm179, %v65, 0
    %vm186 = vcmask 1043456
    %v188 = vsel %vm186, %v178, 0
    %190 = vmatprep.subr.mxu0 0.0
    %191 = vmatpush1.msra.mxu0 %v66
    %192 = vmatprep.subr.mxu0 0.0
    %193 = vmatpush1.msra.mxu0 %v67
    %194 = vmatprep.subr.mxu0 0.0
    %195 = vmatpush1.msra.mxu0 %v68
    %196 = vmatprep.subr.mxu0 0.0
    %197 = vmatpush1.msra.mxu0 %v69
    %198 = vmatprep.subr.mxu0 0.0
    %199 = vmatpush1.msra.mxu0 %v70
    %200 = vmatprep.subr.mxu0 0.0
    %201 = vmatpush1.msra.mxu0 %v71
    %202 = vmatprep.subr.mxu0 0.0
    %203 = vmatpush1.msra.mxu0 %v72
    %204 = vmatprep.subr.mxu0 0.0
    %205 = vmatpush1.msra.mxu0 %v73
    %206 = vmatprep.subr.mxu0 0.0
    %207 = vmatpush1.msra.mxu0 %v74
    %208 = vmatprep.subr.mxu0 0.0
    %209 = vmatpush1.msra.mxu0 %v75
    %210 = vmatprep.subr.mxu0 0.0
    %211 = vmatpush1.msra.mxu0 %v76
    %212 = vmatprep.subr.mxu0 0.0
    %213 = vmatpush1.msra.mxu0 %v77
    %214 = vmatprep.subr.mxu0 0.0
    %215 = vmatpush1.msra.mxu0 %v78
    %216 = vmatprep.subr.mxu0 0.0
    %217 = vmatpush1.msra.mxu0 %v79
    %218 = vmatprep.subr.mxu0 0.0
    %219 = vmatpush1.msra.mxu0 %v80
    %220 = vmatprep.subr.mxu0 0.0
    %221 = vmatpush1.msra.mxu0 %v81
    %222 = vmatprep.subr.mxu0 0.0
    %223 = vmatpush1.msra.mxu0 %v82
    %224 = vmatprep.subr.mxu0 0.0
    %225 = vmatpush1.msra.mxu0 %v83
    %226 = vmatprep.subr.mxu0 0.0
    %227 = vmatpush1.msra.mxu0 %v84
    %228 = vmatprep.subr.mxu0 0.0
    %229 = vmatpush1.msra.mxu0 %v85
    %230 = vmatprep.subr.mxu0 0.0
    %231 = vmatpush1.msra.mxu0 %v86
    %232 = vmatprep.subr.mxu0 0.0
    %233 = vmatpush1.msra.mxu0 %v87
    %234 = vmatprep.subr.mxu0 0.0
    %235 = vmatpush1.msra.mxu0 %v88
    %236 = vmatprep.subr.mxu0 0.0
    %237 = vmatpush1.msra.mxu0 %v89
    %238 = vmatprep.subr.mxu0 0.0
    %239 = vmatpush1.msra.mxu0 %v90
    %240 = vmatprep.subr.mxu0 0.0
    %241 = vmatpush1.msra.mxu0 %v91
    %242 = vmatprep.subr.mxu0 0.0
    %243 = vmatpush1.msra.mxu0 %v92
    %244 = vmatprep.subr.mxu0 0.0
    %245 = vmatpush1.msra.mxu0 %v93
    %246 = vmatprep.subr.mxu0 0.0
    %247 = vmatpush1.msra.mxu0 %v94
    %248 = vmatprep.subr.mxu0 0.0
    %249 = vmatpush1.msra.mxu0 %v95
    %250 = vmatprep.subr.mxu0 0.0
    %251 = vmatpush1.msra.mxu0 %v96
    %252 = vmatprep.subr.mxu0 0.0
    %253 = vmatpush1.msra.mxu0 %v97
    %254 = vmatprep.mubr.f32.mxu0 %v51
    %255 = vmatmul.mubr.f32.gmra.mrb[0].mxu0 %v50
    %v256 = vpop.f32.mrb[0].mxu0
    %v257 = vadd.f32 0.0, %v256
    %v258 = vpop.f32.mrb[0].mxu0
    %259 = vmatprep.mubr.f32.mxu0 %v59
    %260 = vmatmul.mubr.f32.gmra.mrb[0].mxu0 %v58
    %v261 = vpop.f32.mrb[0].mxu0
    %v262 = vadd.f32 0.0, %v261
    %v263 = vpop.f32.mrb[0].mxu0
    %264 = vdwg.mxu0
    %265 = vmatprep.subr.mxu0 0.0
    %266 = vmatpush1.msra.mxu0 %v98
    %267 = vmatprep.subr.mxu0 0.0
    %268 = vmatpush1.msra.mxu0 %v99
    %269 = vmatprep.subr.mxu0 0.0
    %270 = vmatpush1.msra.mxu0 %v100
    %271 = vmatprep.subr.mxu0 0.0
    %272 = vmatpush1.msra.mxu0 %v101
    %273 = vmatprep.subr.mxu0 0.0
    %274 = vmatpush1.msra.mxu0 %v102
    %275 = vmatprep.subr.mxu0 0.0
    %276 = vmatpush1.msra.mxu0 %v103
    %277 = vmatprep.subr.mxu0 0.0
    %278 = vmatpush1.msra.mxu0 %v104
    %279 = vmatprep.subr.mxu0 0.0
    %280 = vmatpush1.msra.mxu0 %v105
    %281 = vmatprep.subr.mxu0 0.0
    %282 = vmatpush1.msra.mxu0 %v106
    %283 = vmatprep.subr.mxu0 0.0
    %284 = vmatpush1.msra.mxu0 %v107
    %285 = vmatprep.subr.mxu0 0.0
    %286 = vmatpush1.msra.mxu0 %v108
    %287 = vmatprep.subr.mxu0 0.0
    %288 = vmatpush1.msra.mxu0 %v109
    %289 = vmatprep.subr.mxu0 0.0
    %290 = vmatpush1.msra.mxu0 %v110
    %291 = vmatprep.subr.mxu0 0.0
    %292 = vmatpush1.msra.mxu0 %v111
    %293 = vmatprep.subr.mxu0 0.0
    %294 = vmatpush1.msra.mxu0 %v112
    %295 = vmatprep.subr.mxu0 0.0
    %296 = vmatpush1.msra.mxu0 %v113
    %297 = vmatprep.subr.mxu0 0.0
    %298 = vmatpush1.msra.mxu0 %v114
    %299 = vmatprep.subr.mxu0 0.0
    %300 = vmatpush1.msra.mxu0 %v115
    %301 = vmatprep.subr.mxu0 0.0
    %302 = vmatpush1.msra.mxu0 %v116
    %303 = vmatprep.subr.mxu0 0.0
    %304 = vmatpush1.msra.mxu0 %v117
    %305 = vmatprep.subr.mxu0 0.0
    %306 = vmatpush1.msra.mxu0 %v118
    %307 = vmatprep.subr.mxu0 0.0
    %308 = vmatpush1.msra.mxu0 %v119
    %309 = vmatprep.subr.mxu0 0.0
    %310 = vmatpush1.msra.mxu0 %v120
    %311 = vmatprep.subr.mxu0 0.0
    %312 = vmatpush1.msra.mxu0 %v121
    %313 = vmatprep.subr.mxu0 0.0
    %314 = vmatpush1.msra.mxu0 %v122
    %315 = vmatprep.subr.mxu0 0.0
    %316 = vmatpush1.msra.mxu0 %v123
    %317 = vmatprep.subr.mxu0 0.0
    %318 = vmatpush1.msra.mxu0 %v124
    %319 = vmatprep.subr.mxu0 0.0
    %320 = vmatpush1.msra.mxu0 %v125
    %321 = vmatprep.subr.mxu0 0.0
    %322 = vmatpush1.msra.mxu0 %v126
    %323 = vmatprep.subr.mxu0 0.0
    %324 = vmatpush1.msra.mxu0 %v127
    %325 = vmatprep.subr.mxu0 0.0
    %326 = vmatpush1.msra.mxu0 %v128
    %327 = vmatprep.subr.mxu0 0.0
    %328 = vmatpush1.msra.mxu0 %v129
    %329 = vmatprep.mubr.f32.mxu0 %v53
    %330 = vmatmul.mubr.f32.gmra.mrb[0].mxu0 %v52
    %v331 = vpop.f32.mrb[0].mxu0
    %v332 = vadd.f32 %v257, %v331
    %v333 = vpop.f32.mrb[0].mxu0
    %334 = vmatprep.mubr.f32.mxu0 %v61
    %335 = vmatmul.mubr.f32.gmra.mrb[0].mxu0 %v60
    %v336 = vpop.f32.mrb[0].mxu0
    %v337 = vadd.f32 %v262, %v336
    %v338 = vpop.f32.mrb[0].mxu0
    %339 = vdwg.mxu0
    %340 = vmatprep.subr.mxu0 0.0
    %341 = vmatpush1.msra.mxu0 %v130
    %342 = vmatprep.subr.mxu0 0.0
    %343 = vmatpush1.msra.mxu0 %v131
    %344 = vmatprep.subr.mxu0 0.0
    %345 = vmatpush1.msra.mxu0 %v132
    %346 = vmatprep.subr.mxu0 0.0
    %347 = vmatpush1.msra.mxu0 %v133
    %348 = vmatprep.subr.mxu0 0.0
    %349 = vmatpush1.msra.mxu0 %v134
    %350 = vmatprep.subr.mxu0 0.0
    %351 = vmatpush1.msra.mxu0 %v135
    %352 = vmatprep.subr.mxu0 0.0
    %353 = vmatpush1.msra.mxu0 %v136
    %354 = vmatprep.subr.mxu0 0.0
    %355 = vmatpush1.msra.mxu0 %v137
    %356 = vmatprep.subr.mxu0 0.0
    %357 = vmatpush1.msra.mxu0 %v138
    %358 = vmatprep.subr.mxu0 0.0
    %359 = vmatpush1.msra.mxu0 %v139
    %360 = vmatprep.subr.mxu0 0.0
    %361 = vmatpush1.msra.mxu0 %v140
    %362 = vmatprep.subr.mxu0 0.0
    %363 = vmatpush1.msra.mxu0 %v141
    %364 = vmatprep.subr.mxu0 0.0
    %365 = vmatpush1.msra.mxu0 %v142
    %366 = vmatprep.subr.mxu0 0.0
    %367 = vmatpush1.msra.mxu0 %v143
    %368 = vmatprep.subr.mxu0 0.0
    %369 = vmatpush1.msra.mxu0 %v144
    %370 = vmatprep.subr.mxu0 0.0
    %371 = vmatpush1.msra.mxu0 %v145
    %372 = vmatprep.subr.mxu0 0.0
    %373 = vmatpush1.msra.mxu0 %v146
    %374 = vmatprep.subr.mxu0 0.0
    %375 = vmatpush1.msra.mxu0 %v147
    %376 = vmatprep.subr.mxu0 0.0
    %377 = vmatpush1.msra.mxu0 %v148
    %378 = vmatprep.subr.mxu0 0.0
    %379 = vmatpush1.msra.mxu0 %v149
    %380 = vmatprep.subr.mxu0 0.0
    %381 = vmatpush1.msra.mxu0 %v150
    %382 = vmatprep.subr.mxu0 0.0
    %383 = vmatpush1.msra.mxu0 %v151
    %384 = vmatprep.subr.mxu0 0.0
    %385 = vmatpush1.msra.mxu0 %v152
    %386 = vmatprep.subr.mxu0 0.0
    %387 = vmatpush1.msra.mxu0 %v153
    %388 = vmatprep.subr.mxu0 0.0
    %389 = vmatpush1.msra.mxu0 %v154
    %390 = vmatprep.subr.mxu0 0.0
    %391 = vmatpush1.msra.mxu0 %v155
    %392 = vmatprep.subr.mxu0 0.0
    %393 = vmatpush1.msra.mxu0 %v156
    %394 = vmatprep.subr.mxu0 0.0
    %395 = vmatpush1.msra.mxu0 %v157
    %396 = vmatprep.subr.mxu0 0.0
    %397 = vmatpush1.msra.mxu0 %v158
    %398 = vmatprep.subr.mxu0 0.0
    %399 = vmatpush1.msra.mxu0 %v159
    %400 = vmatprep.subr.mxu0 0.0
    %401 = vmatpush1.msra.mxu0 %v160
    %402 = vmatprep.subr.mxu0 0.0
    %403 = vmatpush1.msra.mxu0 %v161
    %404 = vmatprep.mubr.f32.mxu0 %v55
    %405 = vmatmul.mubr.f32.gmra.mrb[0].mxu0 %v54
    %v406 = vpop.f32.mrb[0].mxu0
    %v407 = vadd.f32 %v332, %v406
    %v408 = vpop.f32.mrb[0].mxu0
    %409 = vmatprep.mubr.f32.mxu0 %v63
    %410 = vmatmul.mubr.f32.gmra.mrb[0].mxu0 %v62
    %v411 = vpop.f32.mrb[0].mxu0
    %v412 = vadd.f32 %v337, %v411
    %v413 = vpop.f32.mrb[0].mxu0
    %414 = vdwg.mxu0
    %415 = vmatprep.subr.mxu0 0.0
    %416 = vmatpush1.msra.mxu0 %v162
    %417 = vmatprep.subr.mxu0 0.0
    %418 = vmatpush1.msra.mxu0 %v163
    %419 = vmatprep.subr.mxu0 0.0
    %420 = vmatpush1.msra.mxu0 %v164
    %421 = vmatprep.subr.mxu0 0.0
    %422 = vmatpush1.msra.mxu0 %v165
    %423 = vmatprep.subr.mxu0 0.0
    %424 = vmatpush1.msra.mxu0 %v166
    %425 = vmatprep.subr.mxu0 0.0
    %426 = vmatpush1.msra.mxu0 %v167
    %427 = vmatprep.subr.mxu0 0.0
    %428 = vmatpush1.msra.mxu0 %v168
    %429 = vmatprep.subr.mxu0 0.0
    %430 = vmatpush1.msra.mxu0 %v169
    %431 = vmatprep.subr.mxu0 0.0
    %432 = vmatpush1.msra.mxu0 %v170
    %433 = vmatprep.subr.mxu0 0.0
    %434 = vmatpush1.msra.mxu0 %v171
    %435 = vmatprep.subr.mxu0 0.0
    %436 = vmatpush1.msra.mxu0 %v172
    %437 = vmatprep.subr.mxu0 0.0
    %438 = vmatpush1.msra.mxu0 %v173
    %439 = vmatprep.subr.mxu0 0.0
    %440 = vmatpush1.msra.mxu0 %v174
    %441 = vmatprep.subr.mxu0 0.0
    %442 = vmatpush1.msra.mxu0 %v175
    %443 = vmatprep.subr.mxu0 0.0
    %444 = vmatpush1.msra.mxu0 %v176
    %445 = vmatprep.subr.mxu0 0.0
    %446 = vmatpush1.msra.mxu0 %v177
    %447 = vmatprep.subr.mxu0 0.0
    %448 = vmatpush1.msra.mxu0 %v188
    %449 = vmatprep.subr.mxu0 0.0
    %450 = vmatpush1.msra.mxu0 0.0
    %451 = vmatprep.subr.mxu0 0.0
    %452 = vmatpush1.msra.mxu0 0.0
    %453 = vmatprep.subr.mxu0 0.0
    %454 = vmatpush1.msra.mxu0 0.0
    %455 = vmatprep.subr.mxu0 0.0
    %456 = vmatpush1.msra.mxu0 0.0
    %457 = vmatprep.subr.mxu0 0.0
    %458 = vmatpush1.msra.mxu0 0.0
    %459 = vmatprep.subr.mxu0 0.0
    %460 = vmatpush1.msra.mxu0 0.0
    %461 = vmatprep.subr.mxu0 0.0
    %462 = vmatpush1.msra.mxu0 0.0
    %463 = vmatprep.subr.mxu0 0.0
    %464 = vmatpush1.msra.mxu0 0.0
    %465 = vmatprep.subr.mxu0 0.0
    %466 = vmatpush1.msra.mxu0 0.0
    %467 = vmatprep.subr.mxu0 0.0
    %468 = vmatpush1.msra.mxu0 0.0
    %469 = vmatprep.subr.mxu0 0.0
    %470 = vmatpush1.msra.mxu0 0.0
    %471 = vmatprep.subr.mxu0 0.0
    %472 = vmatpush1.msra.mxu0 0.0
    %473 = vmatprep.subr.mxu0 0.0
    %474 = vmatpush1.msra.mxu0 0.0
    %475 = vmatprep.subr.mxu0 0.0
    %476 = vmatpush1.msra.mxu0 0.0
    %477 = vmatprep.subr.mxu0 0.0
    %478 = vmatpush1.msra.mxu0 0.0
    %479 = vmatprep.mubr.f32.mxu0 %v181
    %480 = vmatmul.mubr.f32.gmra.mrb[0].mxu0 %v56
    %v481 = vpop.f32.mrb[0].mxu0
    %v482 = vadd.f32 %v407, %v481
    %v483 = vpop.f32.mrb[0].mxu0
    %484 = vmatprep.mubr.f32.mxu0 %v184
    %485 = vmatmul.mubr.f32.gmra.mrb[0].mxu0 %v64
    %v486 = vpop.f32.mrb[0].mxu0
    %v487 = vadd.f32 %v412, %v486
    %v488 = vpop.f32.mrb[0].mxu0
    %489 = vdwg.mxu0
    %v490 = vrot.slane %v482, 4
    %v491 = vmax.f32 %v482, %v490
    %v492 = vrot.slane %v491, 2
    %v493 = vmax.f32 %v491, %v492
    %v494 = vrot.slane %v493, 1
    %v495 = vmax.f32 %v493, %v494
    %v496 = vrot.slane %v487, 4
    %v497 = vmax.f32 %v487, %v496
    %v498 = vrot.slane %v497, 2
    %v499 = vmax.f32 %v497, %v498
    %v500 = vrot.slane %v499, 1
    %v501 = vmax.f32 %v499, %v500
    %v502 = vrot.slane %v482, 4
    %v503 = vadd.f32 %v482, %v502
    %v504 = vrot.slane %v503, 2
    %v505 = vadd.f32 %v503, %v504
    %v506 = vrot.slane %v505, 1
    %v507 = vadd.f32 %v505, %v506
    %v508 = vrot.slane %v487, 4
    %v509 = vadd.f32 %v487, %v508
    %v510 = vrot.slane %v509, 2
    %v511 = vadd.f32 %v509, %v510
    %v512 = vrot.slane %v511, 1
    %v513 = vadd.f32 %v511, %v512
    %v514 = vld [vmem:[%s2] sm:$0x1]
    %v516 = vlaneseq
    %v517 = vshrl.u32 %v516, 7
    %v518 = vsub.s32 0, %v517
    %v519 = vrot.slane %v514, %v518
    %v521 = vmul.f32 %v495, %v519
    %v522 = vmul.f32 %v501, %v519
    %v523 = vld [vmem:[%s3] sm:$0x1]
    %v525 = vlaneseq
    %v526 = vshrl.u32 %v525, 7
    %v527 = vsub.s32 0, %v526
    %v528 = vrot.slane %v523, %v527
    %v530 = vmul.f32 %v507, %v528
    %v531 = vmul.f32 %v513, %v528
    %v532 = vadd.f32 %v521, %v530
    %v533 = vadd.f32 %v522, %v531
    %v536 = vrot.slane %v533, 7
    %vm537 = vcmask 1041409
    %v538 = vsel %vm537, %v536, %v532
    %vm540 = vcmask 1041408
    %v541 = vsel %vm540, %v538, 0.0
    %542 = vadd.xlane.f32.xlu0 %v541
    %v543 = vpop.xlane.xlu0 %542
    %s544 = sld [smem:[#allocation2]]
    %v545 = vstv %s544
    %v546 = vadd.f32 %v543, %v545
    %v548 = vlaneseq
    %v549 = vand.u32 %v548, 127
    %v550 = vlaneseq
    %v551 = vshrl.u32 %v550, 7
    %v552 = vsub.s32 %v549, %v551
    %v553 = vrot.slane %v546, %v552
    %vm555 = vcmask 8192
    %556 = vst.msk [vmem:[#allocation8] sm:$0x1] %vm555, %v553
    // Predicated region
    $region30: #{tpu_custom_call.1} parent=1 // pred_check
      _
    $region31: #{tpu_custom_call.1} parent=1 // pred_check_branch
      %558 = sbr.rel (0) target = $region33
    $region32: #{tpu_custom_call.1} parent=1 // pred_region
      %s560 = ssub.s32 16, 16
      %561 = vsyncadd [#allocation5], %s560
      %s563 = sshll.u32 [#allocation8], 4
      %s564 = int_to_ptr.vmem [resolvable:$true] %s563
      %566 = dma.vmem_to_hbm [thread:$0]  %s564, 16, %s5, [#allocation5]
    $region33: #{tpu_custom_call.1} parent=1 // pred_fallthru
      _
    // Predicated region
    $region34: #{tpu_custom_call.1} parent=1 // pred_check
      _
    $region35: #{tpu_custom_call.1} parent=1 // pred_check_branch
      %568 = sbr.rel (0) target = $region37
    $region36: #{tpu_custom_call.1} parent=1 // pred_region
      %569 = dma.done [#allocation5], 16
    $region37: #{tpu_custom_call.1} parent=1 // pred_fallthru
      _
    %570 = vsyncpa [#allocation4], 1
    %571 = vsyncpa [#allocation7], 1
    %572 = vsyncpa [#allocation5], 1

</llo_original>
